<compile_context>
chip_gen: v7x
topology: tpu7x:2x2x1
jax: 0.10.0
libtpu: 0.0.40
codegen_flags: <defaults>
</compile_context>

<pallas_src>
import functools

import jax
import jax.numpy as jnp
from jax import lax
from jax.experimental import pallas as pl
from jax.experimental.pallas import tpu as pltpu


def _relu(y):
    return jnp.maximum(y, 0.0)


def _round_up(x: int, m: int) -> int:
    return ((x + m - 1) // m) * m


def _vmem_capacity_bytes() -> int:
    try:
        return int(pltpu.get_tpu_info().vmem_capacity_bytes)
    except Exception:
        return 64 * 1024 * 1024  # conservative fallback (v7x per-core VMEM)


def _mask_k_tail(x, w, k, k_total, mask_k):
    """Zero out-of-range K columns of the (ragged) last K block of x and w."""
    if not mask_k:
        return x, w
    tk = x.shape[-1]
    rem = k_total - k * tk                                   # valid cols this step
    col = lax.broadcasted_iota(jnp.int32, (1, tk), 1)
    valid = col < rem
    x = jnp.where(valid, x, jnp.zeros_like(x))
    w = jnp.where(valid, w, jnp.zeros_like(w))
    return x, w


def _kernel_f32_out(x_ref, w_ref, b_ref, o_ref, *, activation, k_total, mask_k):
    # float32 output: accumulate directly into the resident output block.
    k = pl.program_id(2)

    @pl.when(k == 0)
    def _():
        o_ref[...] = jnp.zeros_like(o_ref)

    x, w = _mask_k_tail(x_ref[...], w_ref[...], k, k_total, mask_k)
    # Contract last dims of x (tb, tk) and w (tn, tk): MXU-native x @ w^T.
    o_ref[...] += lax.dot_general(
        x, w, dimension_numbers=(((1,), (1,)), ((), ())),
        preferred_element_type=jnp.float32)

    @pl.when(k == pl.num_programs(2) - 1)
    def _():
        y = o_ref[...] + b_ref[...].astype(jnp.float32)
        o_ref[...] = activation(y)


def _kernel_acc_out(x_ref, w_ref, b_ref, o_ref, acc_ref, *, activation, k_total,
                    mask_k):
    # non-f32 output: f32 VMEM accumulator, cast in the epilogue.
    k = pl.program_id(2)

    @pl.when(k == 0)
    def _():
        acc_ref[...] = jnp.zeros_like(acc_ref)

    x, w = _mask_k_tail(x_ref[...], w_ref[...], k, k_total, mask_k)
    acc_ref[...] += lax.dot_general(
        x, w, dimension_numbers=(((1,), (1,)), ((), ())),
        preferred_element_type=jnp.float32)

    @pl.when(k == pl.num_programs(2) - 1)
    def _():
        y = acc_ref[...] + b_ref[...].astype(jnp.float32)
        o_ref[...] = activation(y).astype(o_ref.dtype)


def layer_forward(x, weight, bias, *, activation=None, compute_dtype=None,
                  tile_b=512, tile_n=512, tile_k=1024, force_pallas=False):
    """Pallas equivalent of Layer.forward.

    x:       (B, inputCount)
    weight:  (nodeCount, inputCount)   -- native nn.Linear layout (NOT transposed)
    bias:    (nodeCount,)
    activation: jnp-traceable elementwise fn applied in f32 (default: ReLU)
    compute_dtype: optional operand dtype for the MXU (jnp.bfloat16 recommended on
        v6e/v7x; prefer persisting a bf16 weight copy caller-side to avoid the
        per-call cast).  Accumulation and the epilogue always stay float32.
    """
    if activation is None:
        activation = _relu

    B, K = x.shape
    N, K2 = weight.shape
    assert K == K2, "inputCount mismatch"
    assert bias.shape == (N,)
    out_dtype = x.dtype

    if compute_dtype is not None:
        x = x.astype(compute_dtype)
        weight = weight.astype(compute_dtype)

    # Small-problem bypass: a grid=(1,1,1) pallas_call cannot beat a fused XLA dot
    # at sub-microsecond sizes on any TPU generation.
    if not force_pallas and 2 * B * K * N < (1 << 21):
        y = lax.dot_general(x, weight, (((1,), (1,)), ((), ())),
                            preferred_element_type=jnp.float32,
                            precision=lax.Precision.HIGHEST)
        y = y + bias.astype(jnp.float32)
        return activation(y).astype(out_dtype)

    cd_size = jnp.dtype(x.dtype).itemsize
    out_size = jnp.dtype(out_dtype).itemsize
    b_size = jnp.dtype(bias.dtype).itemsize
    align_b = {4: 8, 2: 16, 1: 32}.get(cd_size, 8)   # sublane packing of operands
    f32_out = jnp.dtype(out_dtype) == jnp.dtype(jnp.float32)

    # ---- per-generation VMEM-aware tile caps ----
    cap_b = max(align_b, (int(tile_b) // align_b) * align_b)
    cap_n = max(128, (int(tile_n) // 128) * 128)
    cap_k = max(128, (int(tile_k) // 128) * 128)

    capacity = _vmem_capacity_bytes()
    budget = int(capacity * 0.55)

    def vmem_need(tb_, tn_, tk_):
        need = 2 * tb_ * tk_ * cd_size          # x    (double-buffered)
        need += 2 * tn_ * tk_ * cd_size         # W
        need += 2 * tb_ * tn_ * out_size        # out
        need += 2 * tn_ * b_size                # bias
        if not f32_out:
            need += tb_ * tn_ * 4               # f32 accumulator scratch
        return need + (2 << 20)                 # Mosaic internal-scratch margin

    while vmem_need(cap_b, cap_n, cap_k) > budget:
        if cap_k >= max(cap_n, 256) and cap_k > 128:
            cap_k = max(128, ((cap_k // 2) // 128) * 128)
        elif cap_n > 128:
            cap_n = max(128, ((cap_n // 2) // 128) * 128)
        elif cap_b > align_b:
            cap_b = max(align_b, ((cap_b // 2) // align_b) * align_b)
        else:
            break

    # Full-dim block when a dimension fits its cap (no padding, no ragged edge);
    # otherwise an aligned tile with a cdiv (ragged) grid.
    tb = B if B <= cap_b else cap_b
    tn = N if N <= cap_n else cap_n
    tk = K if K <= cap_k else cap_k

    # v7x megacore: ensure at least one "parallel" axis has >= 2 blocks on big work.
    if (2 * B * K * N >= (1 << 27)
            and pl.cdiv(B, tb) == 1 and pl.cdiv(N, tn) == 1):
        if N >= 256:
            tn = _round_up(pl.cdiv(N, 2), 128)
        elif B >= 2 * align_b:
            tb = _round_up(pl.cdiv(B, 2), align_b)

    grid = (pl.cdiv(B, tb), pl.cdiv(N, tn), pl.cdiv(K, tk))
    mask_k = (K % tk) != 0

    b2d = bias.reshape(1, N)

    nb_b, nb_n = grid[0], grid[1]
    cost = pl.CostEstimate(
        flops=2 * B * K * N,
        bytes_accessed=(nb_n * B * K * cd_size      # x streamed once per N tile
                        + nb_b * N * K * cd_size    # W streamed once per B tile
                        + nb_b * N * b_size         # bias
                        + B * N * out_size),        # output written once
        transcendentals=0,
    )

    if f32_out:
        kernel = functools.partial(_kernel_f32_out, activation=activation,
                                   k_total=K, mask_k=mask_k)
        scratch = []
    else:
        kernel = functools.partial(_kernel_acc_out, activation=activation,
                                   k_total=K, mask_k=mask_k)
        scratch = [pltpu.VMEM((tb, tn), jnp.float32)]

    vmem_limit = int(min(capacity * 9 // 10,
                         max(32 << 20, 2 * vmem_need(tb, tn, tk))))

    # TODO(synk): pipeline_mode=pl.Buffered(3) on the weight spec may help the
    # weight-bandwidth-bound small-batch regime; left at the default depth here.
    out = pl.pallas_call(
        kernel,
        out_shape=jax.ShapeDtypeStruct((B, N), out_dtype),
        grid_spec=pltpu.PrefetchScalarGridSpec(
            num_scalar_prefetch=0,
            grid=grid,
            in_specs=[
                pl.BlockSpec((tb, tk), lambda i, j, k: (i, k)),   # x tile
                pl.BlockSpec((tn, tk), lambda i, j, k: (j, k)),   # W tile (N, K)
                pl.BlockSpec((1, tn), lambda i, j, k: (0, j)),    # bias tile
            ],
            out_specs=pl.BlockSpec((tb, tn), lambda i, j, k: (i, j)),
            scratch_shapes=scratch,
        ),
        compiler_params=pltpu.CompilerParams(
            dimension_semantics=("parallel", "parallel", "arbitrary"),
            vmem_limit_bytes=vmem_limit,
        ),
        cost_estimate=cost,
    )(x, weight, b2d)
    return out


def layer_reference(x, weight, bias, activation=None):
    if activation is None:
        activation = _relu
    y = lax.dot_general(x.astype(jnp.float32), weight.astype(jnp.float32),
                        (((1,), (1,)), ((), ())),
                        precision=lax.Precision.HIGHEST)
    return activation(y + bias.astype(jnp.float32))


if __name__ == "__main__":
    key = jax.random.PRNGKey(0)

    def make_inputs(k, b, kin, n):
        kx, kw, kb = jax.random.split(k, 3)
        bound = 1.0 / (kin ** 0.5)
        x = jax.random.normal(kx, (b, kin), dtype=jnp.float32)
        w = jax.random.uniform(kw, (n, kin), jnp.float32, -bound, bound)
        bia = jax.random.uniform(kb, (n,), jnp.float32, -bound, bound)
        return x, w, bia

    k1, k2, k3, k4, k5 = jax.random.split(key, 5)

    # Test 1: small shape matching the module (batch=8, inputCount=32, nodeCount=32).
    x, w, b = make_inputs(k1, 8, 32, 32)
    out = jax.block_until_ready(layer_forward(x, w, b, force_pallas=True))
    ref = layer_reference(x, w, b)
    assert out.shape == (8, 32) and out.dtype == jnp.float32
    assert jnp.allclose(out, ref, atol=2.5e-2, rtol=2.5e-2), "test1 mismatch"
    out_fb = jax.block_until_ready(layer_forward(x, w, b))   # small-problem bypass
    assert jnp.allclose(out_fb, ref, atol=2.5e-2, rtol=2.5e-2), "test1 fb mismatch"

    # Test 2: non-aligned dims -> full-dim blocks, no padding, no output slice.
    x, w, b = make_inputs(k2, 50, 96, 200)
    out = jax.block_until_ready(layer_forward(x, w, b, force_pallas=True))
    ref = layer_reference(x, w, b)
    assert out.shape == (50, 200)
    assert jnp.allclose(out, ref, atol=2.5e-2, rtol=2.5e-2), "test2 mismatch"

    # Test 3: ragged tiled grids on every axis + in-kernel K-tail masking
    # (tiles forced small so the 3-D accumulator pipeline is exercised).
    x, w, b = make_inputs(k3, 100, 300, 200)
    out = jax.block_until_ready(layer_forward(
        x, w, b, force_pallas=True, tile_b=64, tile_n=128, tile_k=128))
    ref = layer_reference(x, w, b)
    assert out.shape == (100, 200)
    assert jnp.allclose(out, ref, atol=2.5e-2, rtol=2.5e-2), "test3 mismatch"

    # Test 4: bf16 operand path (f32 accumulation/epilogue) — recommended on v6e/v7x.
    x, w, b = make_inputs(k4, 128, 256, 256)
    out = jax.block_until_ready(layer_forward(
        x, w, b, force_pallas=True, compute_dtype=jnp.bfloat16))
    ref = layer_reference(x, w, b)
    assert out.dtype == jnp.float32
    assert jnp.allclose(out, ref, atol=5e-2, rtol=5e-2), "test4 mismatch"

    # Test 5: non-default activation (activation_function is a constructor arg).
    x, w, b = make_inputs(k5, 16, 64, 64)
    out = jax.block_until_ready(layer_forward(
        x, w, b, activation=jnp.tanh, force_pallas=True))
    ref = layer_reference(x, w, b, activation=jnp.tanh)
    assert jnp.allclose(out, ref, atol=2.5e-2, rtol=2.5e-2), "test5 mismatch"

    # TODO(synk): arbitrary torch.nn activation modules are not auto-translated;
    # any jnp-expressible elementwise callable is supported (ReLU is the default).
    print("KERNEL_OK")
</pallas_src>

<mosaic_0001>
module attributes {stable_mosaic.version = 11 : i64} {
  func.func @_kernel_f32_out(%arg0: i32, %arg1: i32, %arg2: i32, %arg3: memref<8x32xf32, #tpu.memory_space<vmem>>, %arg4: memref<32x32xf32, #tpu.memory_space<vmem>>, %arg5: memref<1x32xf32, #tpu.memory_space<vmem>>, %arg6: memref<8x32xf32, #tpu.memory_space<vmem>>) attributes {dimension_semantics = [#tpu.dimension_semantics<parallel>, #tpu.dimension_semantics<parallel>, #tpu.dimension_semantics<arbitrary>], iteration_bounds = array<i64: 1, 1, 1>, scalar_prefetch = 0 : i64, scratch_operands = 0 : i64, tpu.core_type = #tpu.core_type<tc>, window_params = [{transform_indices = @transform_0, window_bounds = array<i64: 8, 32>}, {transform_indices = @transform_1, window_bounds = array<i64: 32, 32>}, {transform_indices = @transform_2, window_bounds = array<i64: 1, 32>}, {transform_indices = @transform_3, window_bounds = array<i64: 8, 32>}]} {
    %c0_i32 = arith.constant 0 : i32
    %0 = arith.cmpi eq, %arg2, %c0_i32 : i32
    %1 = arith.extui %0 : i1 to i32
    %c0_i32_0 = arith.constant 0 : i32
    %2 = arith.cmpi ne, %1, %c0_i32_0 : i32
    scf.if %2 {
      %cst_10 = arith.constant 0.000000e+00 : f32
      %12 = vector.broadcast %cst_10 : f32 to vector<8x32xf32>
      %c0_11 = arith.constant 0 : index
      %c0_12 = arith.constant 0 : index
      %13 = vector.load %arg6[%c0_11, %c0_12] : memref<8x32xf32, #tpu.memory_space<vmem>>, vector<8x32xf32>
      tpu.vector_store %arg6[%c0_11, %c0_12], %12 {strides = array<i32>} : memref<8x32xf32, #tpu.memory_space<vmem>>, vector<8x32xf32>,
    } else {
    }
    %c0 = arith.constant 0 : index
    %c0_1 = arith.constant 0 : index
    %3 = vector.load %arg3[%c0, %c0_1] : memref<8x32xf32, #tpu.memory_space<vmem>>, vector<8x32xf32>
    %c0_2 = arith.constant 0 : index
    %c0_3 = arith.constant 0 : index
    %4 = vector.load %arg4[%c0_2, %c0_3] : memref<32x32xf32, #tpu.memory_space<vmem>>, vector<32x32xf32>
    %c0_4 = arith.constant 0 : index
    %c0_5 = arith.constant 0 : index
    %5 = vector.load %arg6[%c0_4, %c0_5] : memref<8x32xf32, #tpu.memory_space<vmem>>, vector<8x32xf32>
    %cst = arith.constant dense<0.000000e+00> : vector<8x32xf32>
    %6 = tpu.matmul %3, %4, %cst {dimension_numbers = #tpu.dot_dimension_numbers<[1], [1], [0], [0], [0, 0, 1, 0], [], []>} : vector<8x32xf32>, vector<32x32xf32>, vector<8x32xf32> -> vector<8x32xf32>
    %7 = arith.addf %5, %6 : vector<8x32xf32>
    %c0_6 = arith.constant 0 : index
    %c0_7 = arith.constant 0 : index
    %8 = vector.load %arg6[%c0_6, %c0_7] : memref<8x32xf32, #tpu.memory_space<vmem>>, vector<8x32xf32>
    tpu.vector_store %arg6[%c0_6, %c0_7], %7 {strides = array<i32>} : memref<8x32xf32, #tpu.memory_space<vmem>>, vector<8x32xf32>,
    %c0_i32_8 = arith.constant 0 : i32
    %9 = arith.cmpi eq, %arg2, %c0_i32_8 : i32
    %10 = arith.extui %9 : i1 to i32
    %c0_i32_9 = arith.constant 0 : i32
    %11 = arith.cmpi ne, %10, %c0_i32_9 : i32
    scf.if %11 {
      %c0_10 = arith.constant 0 : index
      %c0_11 = arith.constant 0 : index
      %12 = vector.load %arg6[%c0_10, %c0_11] : memref<8x32xf32, #tpu.memory_space<vmem>>, vector<8x32xf32>
      %c0_12 = arith.constant 0 : index
      %c0_13 = arith.constant 0 : index
      %13 = vector.load %arg5[%c0_12, %c0_13] : memref<1x32xf32, #tpu.memory_space<vmem>>, vector<1x32xf32>
      %14 = vector.broadcast %13 : vector<1x32xf32> to vector<8x32xf32>
      %15 = arith.addf %12, %14 : vector<8x32xf32>
      %cst_14 = arith.constant 0.000000e+00 : f32
      %16 = vector.broadcast %cst_14 : f32 to vector<8x32xf32>
      %17 = arith.maximumf %15, %16 : vector<8x32xf32>
      %c0_15 = arith.constant 0 : index
      %c0_16 = arith.constant 0 : index
      %18 = vector.load %arg6[%c0_15, %c0_16] : memref<8x32xf32, #tpu.memory_space<vmem>>, vector<8x32xf32>
      tpu.vector_store %arg6[%c0_15, %c0_16], %17 {strides = array<i32>} : memref<8x32xf32, #tpu.memory_space<vmem>>, vector<8x32xf32>,
    } else {
    }
    return
  }
  func.func @transform_0(%arg0: i32, %arg1: i32, %arg2: i32) -> (i32, i32) {
    %c0_i32 = arith.constant 0 : i32
    return %arg0, %arg2 : i32, i32
  }
  func.func @transform_1(%arg0: i32, %arg1: i32, %arg2: i32) -> (i32, i32) {
    %c0_i32 = arith.constant 0 : i32
    return %arg1, %arg2 : i32, i32
  }
  func.func @transform_2(%arg0: i32, %arg1: i32, %arg2: i32) -> (i32, i32) {
    %c0_i32 = arith.constant 0 : i32
    %c0_i32_0 = arith.constant 0 : i32
    return %c0_i32, %arg1 : i32, i32
  }
  func.func @transform_3(%arg0: i32, %arg1: i32, %arg2: i32) -> (i32, i32) {
    %c0_i32 = arith.constant 0 : i32
    return %arg0, %arg1 : i32, i32
  }
}

</mosaic_0001>

<llo_original>
// kernel: tpu_custom_call.1
$region0: #{tpu_custom_call.1}
  #allocation0 [shape = 'u32[]', space=smem, size = 0x4, offset = 0x4, fixed_abs, tag = 'smem constant byte address 0x4 - core index']
  #allocation1 [shape = 'u32[144,128]{1,0:T(1,128)}', space=vmem, size = 0x12000, scoped, tag = 'internal scratch']
  %s0 = inlined_call_operand.hbm [shape: f32[8,32], index: 0, kind: input, shape index: {}]
  %s1 = inlined_call_operand.hbm [shape: f32[32,32], index: 1, kind: input, shape index: {}]
  %s2 = inlined_call_operand.vmem [shape: f32[1,32], index: 2, kind: input, shape index: {}]
  %s3 = inlined_call_operand.hbm [shape: f32[8,32], index: 3, kind: output, shape index: {}]
  %s4 = sld [smem:[#allocation0]]
  $region38: #{tpu_custom_call.1} parent=0
    _
  %s6 = ssub.s32 1, %s4
  %s7 = scalar_select 0, %s6, %s4
  $region1: #{tpu_custom_call.1} parent=0
    #allocation2 [shape = 'u8[4096]{0}', space=vmem, size = 0x1000, scoped, tag = 'input window, operand 0, single buffered']
    #allocation3 [shape = 's32[1]{0}', space=sflag, size = 0x4, scoped, tag = 'scoped memory for tpu_custom_call.1']
    #allocation4 [shape = 's32[1]{0}', space=sflag, size = 0x4, scoped, tag = 'scoped memory for tpu_custom_call.1']
    #allocation5 [shape = 'u8[16384]{0}', space=vmem, size = 0x4000, scoped, tag = 'input window, operand 1, single buffered']
    #allocation6 [shape = 's32[1]{0}', space=sflag, size = 0x4, scoped, tag = 'scoped memory for tpu_custom_call.1']
    #allocation7 [shape = 'u8[4096]{0}', space=vmem, size = 0x1000, scoped, tag = 'output window, operand 0, single buffered']
    %8 = vsyncpa [#allocation3], 0
    %9 = vsyncpa [#allocation6], 0
    %10 = vsyncpa [#allocation4], 0
    // Predicated region
    $region2: #{tpu_custom_call.1} parent=1 // pred_check
      _
    $region3: #{tpu_custom_call.1} parent=1 // pred_check_branch
      %12 = sbr.rel (0) target = $region5
    $region4: #{tpu_custom_call.1} parent=1 // pred_region
      %s14 = ssub.s32 128, 128
      %15 = vsyncadd [#allocation3], %s14
      %s17 = sshll.u32 [#allocation2], 4
      %s18 = int_to_ptr.vmem [resolvable:$true] %s17
      %20 = dma.hbm_to_vmem [thread:$0]  %s0, 128, %s18, [#allocation3]
    $region5: #{tpu_custom_call.1} parent=1 // pred_fallthru
      _
    // Predicated region
    $region6: #{tpu_custom_call.1} parent=1 // pred_check
      _
    $region7: #{tpu_custom_call.1} parent=1 // pred_check_branch
      %22 = sbr.rel (0) target = $region9
    $region8: #{tpu_custom_call.1} parent=1 // pred_region
      %s24 = ssub.s32 512, 512
      %25 = vsyncadd [#allocation6], %s24
      %s26 = sshll.u32 [#allocation5], 4
      %s27 = int_to_ptr.vmem [resolvable:$true] %s26
      %32 = dma.hbm_to_vmem [thread:$0]  %s1, 512, %s27, [#allocation6], 128, 128, 8
    $region9: #{tpu_custom_call.1} parent=1 // pred_fallthru
      _
    // Predicated region
    $region10: #{tpu_custom_call.1} parent=1 // pred_check
      _
    $region11: #{tpu_custom_call.1} parent=1 // pred_check_branch
      %34 = sbr.rel (0) target = $region13
    $region12: #{tpu_custom_call.1} parent=1 // pred_region
      _
    $region13: #{tpu_custom_call.1} parent=1 // pred_fallthru
      _
    // Predicated region
    $region14: #{tpu_custom_call.1} parent=1 // pred_check
      _
    $region15: #{tpu_custom_call.1} parent=1 // pred_check_branch
      %36 = sbr.rel (0) target = $region17
    $region16: #{tpu_custom_call.1} parent=1 // pred_region
      %37 = dma.done [#allocation3], 128
    $region17: #{tpu_custom_call.1} parent=1 // pred_fallthru
      _
    // Predicated region
    $region18: #{tpu_custom_call.1} parent=1 // pred_check
      _
    $region19: #{tpu_custom_call.1} parent=1 // pred_check_branch
      %39 = sbr.rel (0) target = $region21
    $region20: #{tpu_custom_call.1} parent=1 // pred_region
      %40 = dma.done [#allocation6], 512
    $region21: #{tpu_custom_call.1} parent=1 // pred_fallthru
      _
    %p41 = scmp.eq.s32.totalorder 0, 0
    // Predicated region
    $region22: #{tpu_custom_call.1} parent=1 // pred_check
      %p42 = pneg %p41
    $region23: #{tpu_custom_call.1} parent=1 // pred_check_branch
      %44 = sbr.rel (%p42) target = $region25
    $region24: #{tpu_custom_call.1} parent=1 // pred_region
      %vm45 = vcmask 261120
      %46 = vst.msk [vmem:[#allocation7] sm:$0xff] %vm45, 0.0
    $region25: #{tpu_custom_call.1} parent=1 // pred_fallthru
      _
    %v47 = vld [vmem:[#allocation2] sm:$0xff]
    %v48 = vld [vmem:[#allocation5] sm:$0xff]
    %v49 = vld [vmem:[#allocation5 + $0x8] sm:$0xff]
    %v50 = vld [vmem:[#allocation5 + $0x10] sm:$0xff]
    %v51 = vld [vmem:[#allocation5 + $0x18] sm:$0xff]
    %v52 = vld [vmem:[#allocation7] sm:$0xff]
    %vm53 = vcmask 261120
    %v55 = vsel %vm53, %v47, 0
    %v58 = vsel %vm53, %v48, 0
    %v61 = vsel %vm53, %v49, 0
    %v64 = vsel %vm53, %v50, 0
    %v67 = vsel %vm53, %v51, 0
    %69 = vmatprep.subr.mxu0 0.0
    %70 = vmatpush1.xpose.msra.mxu0 %v58
    %71 = vmatprep.subr.mxu0 0.0
    %72 = vmatpush1.xpose.msra.mxu0 %v61
    %73 = vmatprep.subr.mxu0 0.0
    %74 = vmatpush1.xpose.msra.mxu0 %v64
    %75 = vmatprep.subr.mxu0 0.0
    %76 = vmatpush1.xpose.msra.mxu0 %v67
    %77 = vmatprep.subr.mxu0 0.0
    %78 = vmatpush1.xpose.msra.mxu0 0.0
    %79 = vmatprep.subr.mxu0 0.0
    %80 = vmatpush1.xpose.msra.mxu0 0.0
    %81 = vmatprep.subr.mxu0 0.0
    %82 = vmatpush1.xpose.msra.mxu0 0.0
    %83 = vmatprep.subr.mxu0 0.0
    %84 = vmatpush1.xpose.msra.mxu0 0.0
    %85 = vmatprep.subr.mxu0 0.0
    %86 = vmatpush1.xpose.msra.mxu0 0.0
    %87 = vmatprep.subr.mxu0 0.0
    %88 = vmatpush1.xpose.msra.mxu0 0.0
    %89 = vmatprep.subr.mxu0 0.0
    %90 = vmatpush1.xpose.msra.mxu0 0.0
    %91 = vmatprep.subr.mxu0 0.0
    %92 = vmatpush1.xpose.msra.mxu0 0.0
    %93 = vmatprep.subr.mxu0 0.0
    %94 = vmatpush1.xpose.msra.mxu0 0.0
    %95 = vmatprep.subr.mxu0 0.0
    %96 = vmatpush1.xpose.msra.mxu0 0.0
    %97 = vmatprep.subr.mxu0 0.0
    %98 = vmatpush1.xpose.msra.mxu0 0.0
    %99 = vmatprep.subr.mxu0 0.0
    %100 = vmatpush1.xpose.msra.mxu0 0.0
    %101 = vmatprep.subr.mxu0 0.0
    %102 = vmatpush1.xpose.msra.mxu0 0.0
    %103 = vmatprep.subr.mxu0 0.0
    %104 = vmatpush1.xpose.msra.mxu0 0.0
    %105 = vmatprep.subr.mxu0 0.0
    %106 = vmatpush1.xpose.msra.mxu0 0.0
    %107 = vmatprep.subr.mxu0 0.0
    %108 = vmatpush1.xpose.msra.mxu0 0.0
    %109 = vmatprep.subr.mxu0 0.0
    %110 = vmatpush1.xpose.msra.mxu0 0.0
    %111 = vmatprep.subr.mxu0 0.0
    %112 = vmatpush1.xpose.msra.mxu0 0.0
    %113 = vmatprep.subr.mxu0 0.0
    %114 = vmatpush1.xpose.msra.mxu0 0.0
    %115 = vmatprep.subr.mxu0 0.0
    %116 = vmatpush1.xpose.msra.mxu0 0.0
    %117 = vmatprep.subr.mxu0 0.0
    %118 = vmatpush1.xpose.msra.mxu0 0.0
    %119 = vmatprep.subr.mxu0 0.0
    %120 = vmatpush1.xpose.msra.mxu0 0.0
    %121 = vmatprep.subr.mxu0 0.0
    %122 = vmatpush1.xpose.msra.mxu0 0.0
    %123 = vmatprep.subr.mxu0 0.0
    %124 = vmatpush1.xpose.msra.mxu0 0.0
    %125 = vmatprep.subr.mxu0 0.0
    %126 = vmatpush1.xpose.msra.mxu0 0.0
    %127 = vmatprep.subr.mxu0 0.0
    %128 = vmatpush1.xpose.msra.mxu0 0.0
    %129 = vmatprep.subr.mxu0 0.0
    %130 = vmatpush1.xpose.msra.mxu0 0.0
    %131 = vmatprep.subr.mxu0 0.0
    %132 = vmatpush1.xpose.msra.mxu0 0.0
    %133 = vmatprep.mubr.f32.mxu0 0.0
    %134 = vmatmul.mubr.f32.gmra.mrb[0].mxu0 %v55
    %v135 = vpop.f32.mrb[0].mxu0
    %v136 = vadd.f32 0.0, %v135
    %v137 = vpop.f32.mrb[0].mxu0
    %138 = vdwg.mxu0
    %v139 = vadd.f32 %v52, %v136
    %140 = vst.msk [vmem:[#allocation7] sm:$0xff] %vm53, %v139
    // Predicated region
    $region26: #{tpu_custom_call.1} parent=1 // pred_check
      %p141 = pneg %p41
    $region27: #{tpu_custom_call.1} parent=1 // pred_check_branch
      %143 = sbr.rel (%p141) target = $region29
    $region28: #{tpu_custom_call.1} parent=1 // pred_region
      %v144 = vld [vmem:[#allocation7] sm:$0xff]
      %v145 = vld [vmem:[%s2] sm:$0x1]
      %v147 = vlaneseq
      %v148 = vshrl.u32 %v147, 7
      %v149 = vsub.s32 0, %v148
      %v150 = vrot.slane %v145, %v149
      %v152 = vadd.f32 %v144, %v150
      %v153 = vmax.f32 %v152, 0.0
      %154 = vst.msk [vmem:[#allocation7] sm:$0xff] %vm53, %v153
    $region29: #{tpu_custom_call.1} parent=1 // pred_fallthru
      _
    // Predicated region
    $region30: #{tpu_custom_call.1} parent=1 // pred_check
      _
    $region31: #{tpu_custom_call.1} parent=1 // pred_check_branch
      %156 = sbr.rel (0) target = $region33
    $region32: #{tpu_custom_call.1} parent=1 // pred_region
      %s158 = ssub.s32 128, 128
      %159 = vsyncadd [#allocation4], %s158
      %s161 = sshll.u32 [#allocation7], 4
      %s162 = int_to_ptr.vmem [resolvable:$true] %s161
      %164 = dma.vmem_to_hbm [thread:$0]  %s162, 128, %s3, [#allocation4]
    $region33: #{tpu_custom_call.1} parent=1 // pred_fallthru
      _
    // Predicated region
    $region34: #{tpu_custom_call.1} parent=1 // pred_check
      _
    $region35: #{tpu_custom_call.1} parent=1 // pred_check_branch
      %166 = sbr.rel (0) target = $region37
    $region36: #{tpu_custom_call.1} parent=1 // pred_region
      %167 = dma.done [#allocation4], 128
    $region37: #{tpu_custom_call.1} parent=1 // pred_fallthru
      _
    %168 = vsyncpa [#allocation3], 1
    %169 = vsyncpa [#allocation6], 1
    %170 = vsyncpa [#allocation4], 1

</llo_original>
